<compile_context>
chip_gen: v7x
topology: tpu7x:2x2x1
jax: 0.10.0
libtpu: 0.0.40
codegen_flags: <defaults>
</compile_context>

<pallas_src>
import jax
import jax.numpy as jnp
from jax.experimental import pallas as pl
from jax.experimental.pallas import tpu as pltpu


# ----------------------------------------------------------------------------
# Kernel
# ----------------------------------------------------------------------------
def d3qn_kernel(x_ref, w1_ref, b1_ref, wh_ref, bh_ref, out_ref):
    # fc1 + ReLU : MXU matmul (f32 accumulate) + f32 bias/ReLU on the VPU.
    x = x_ref[...]
    h = jnp.dot(x, w1_ref[...], preferred_element_type=jnp.float32) + b1_ref[...]
    h = jnp.maximum(h, 0.0)
    # Fused dueling heads (block-diagonal V|A): one MXU push, one dense-ish store.
    h = h.astype(wh_ref.dtype)
    out = jnp.dot(h, wh_ref[...], preferred_element_type=jnp.float32) + bh_ref[...]
    out_ref[...] = out.astype(out_ref.dtype)


# ----------------------------------------------------------------------------
# One-time parameter preparation (hoisted out of the forward)
# ----------------------------------------------------------------------------
def _block_diag(w, p):
    """(in, out) -> (p*in, p*out) block-diagonal with p copies of w."""
    din, dout = w.shape
    eye = jnp.eye(p, dtype=w.dtype)
    return (eye[:, None, :, None] * w[None, :, None, :]).reshape(p * din, p * dout)


def prepare_params(params, *, compute_dtype=None, pack=None):
    """Pack the D3QN weights once for the Pallas kernel.

    params: dict with pre-transposed (in, out) weights and (1, out) biases:
            w1, b1, wv, bv, wa, ba.
    compute_dtype: None (f32) or jnp.bfloat16 (recommended for the large-batch
            training / target-net path on v6e / v7x).
    """
    D, H = params["w1"].shape
    n_actions = params["wa"].shape[1]
    n_head = 1 + n_actions
    # Pack factor: 8 original rows per packed row (D=16 -> 128 lanes exactly).
    p = pack if pack is not None else max(1, min(8, 128 // max(D, 1)))

    wdt = jnp.float32 if compute_dtype is None else compute_dtype

    # Fuse V and A heads, then block-diagonalize everything once.
    w_head = jnp.concatenate([params["wv"], params["wa"]], axis=1)      # (H, 1+nA)
    b_head = jnp.concatenate([params["bv"], params["ba"]], axis=1)      # (1, 1+nA)

    prepared = {
        "p": p, "D": D, "H": H, "n_head": n_head,
        "compute_dtype": compute_dtype,
        "w1": _block_diag(params["w1"].astype(wdt), p),                 # (p*D, p*H)
        "wh": _block_diag(w_head.astype(wdt), p),                       # (p*H, p*n_head)
        "b1": jnp.tile(params["b1"].astype(jnp.float32), (1, p)),       # (1, p*H)
        "bh": jnp.tile(b_head.astype(jnp.float32), (1, p)),             # (1, p*n_head)
    }
    return prepared


# ----------------------------------------------------------------------------
# Forward wrapper
# ----------------------------------------------------------------------------
def d3qn_forward(state, prepared, *, block_b=32768):
    """state: (B, D).  prepared: output of prepare_params.

    Returns (V, A) with shapes (B, 1) and (B, n_actions), like the PyTorch module.
    """
    B, D = state.shape
    p = prepared["p"]
    H = prepared["H"]
    n_head = prepared["n_head"]
    cdt = prepared["compute_dtype"]

    x = state if cdt is None else state.astype(cdt)

    # Pad B to a multiple of the pack factor; padded rows are dropped after.
    b_pad = pl.cdiv(B, p) * p
    if b_pad != B:
        x = jnp.pad(x, ((0, b_pad - B), (0, 0)))
    bp = b_pad // p
    xp = x.reshape(bp, p * D)           # row-pack: free contiguous view, lane-dense

    # Batch tile (in packed rows).  VMEM is not the constraint (a few MiB even
    # at 4096 packed rows double-buffered); per-grid-step overhead is, so use
    # large tiles -- but keep >= 4 grid steps when the batch is big enough so
    # the "parallel" axis can split across v7x's two TensorCores.
    tbp = min(max(8, block_b // p), bp)
    if bp >= 32:
        tbp = min(tbp, ((pl.cdiv(bp, 4) + 7) // 8) * 8)
    if tbp < bp:
        tbp = max(8, (tbp // 8) * 8)    # 8-aligned sublane tiles when tiling
    grid = (pl.cdiv(bp, tbp),)

    out = pl.pallas_call(
        d3qn_kernel,
        out_shape=jax.ShapeDtypeStruct((bp, p * n_head), jnp.float32),
        grid=grid,
        in_specs=[
            pl.BlockSpec((tbp, p * D), lambda i: (i, 0)),          # packed state (pipelined)
            pl.BlockSpec((p * D, p * H), lambda i: (0, 0)),        # block-diag W1 (resident)
            pl.BlockSpec((1, p * H), lambda i: (0, 0)),            # tiled b1      (resident)
            pl.BlockSpec((p * H, p * n_head), lambda i: (0, 0)),   # block-diag V|A(resident)
            pl.BlockSpec((1, p * n_head), lambda i: (0, 0)),       # tiled bv|ba   (resident)
        ],
        out_specs=pl.BlockSpec((tbp, p * n_head), lambda i: (i, 0)),
        compiler_params=pltpu.CompilerParams(
            dimension_semantics=("parallel",),   # v7x: 2 TCs share the batch axis
        ),
    )(xp, prepared["w1"], prepared["b1"], prepared["wh"], prepared["bh"])

    out = out.reshape(b_pad, n_head)[:B]
    V = out[:, :1]
    A = out[:, 1:]
    return V, A


def d3qn_forward_reference(state, params):
    """Plain-XLA path (use this for the tiny per-env-step B~1..8 calls)."""
    h = jnp.maximum(state @ params["w1"] + params["b1"], 0.0)
    return h @ params["wv"] + params["bv"], h @ params["wa"] + params["ba"]


# ----------------------------------------------------------------------------
# Init + self-test
# ----------------------------------------------------------------------------
def init_params(key, input_dim, hidden, n_actions):
    """Deterministic init mimicking nn.Linear default (uniform +/- 1/sqrt(fan_in))."""
    ks = jax.random.split(key, 6)

    def lin(kw, kb, fan_in, fan_out):
        bound = 1.0 / jnp.sqrt(fan_in)
        w = jax.random.uniform(kw, (fan_in, fan_out), jnp.float32, -bound, bound)
        b = jax.random.uniform(kb, (1, fan_out), jnp.float32, -bound, bound)
        return w, b

    w1, b1 = lin(ks[0], ks[1], input_dim, hidden)
    wv, bv = lin(ks[2], ks[3], hidden, 1)
    wa, ba = lin(ks[4], ks[5], hidden, n_actions)
    return {"w1": w1, "b1": b1, "wv": wv, "bv": bv, "wa": wa, "ba": ba}


if __name__ == "__main__":
    key = jax.random.PRNGKey(0)
    k_in, k_in2, k_par = jax.random.split(key, 3)

    D, H, n_actions = 16, 32, 4        # shapes implied by the module (fc1: D->32)
    params = init_params(k_par, D, H, n_actions)

    # ---- f32 path (exact check), B a multiple of the pack factor ------------
    B = 64
    state = jax.random.normal(k_in, (B, D), dtype=jnp.float32)
    prep_f32 = prepare_params(params)                 # one-time packing
    V, A = d3qn_forward(state, prep_f32)
    jax.block_until_ready((V, A))

    V_ref, A_ref = d3qn_forward_reference(state, params)
    assert V.shape == (B, 1) and A.shape == (B, n_actions)
    assert jnp.allclose(V, V_ref, atol=1e-5), "V mismatch (f32)"
    assert jnp.allclose(A, A_ref, atol=1e-5), "A mismatch (f32)"

    # ---- padding path: B not a multiple of 8 --------------------------------
    B2 = 13
    state2 = jax.random.normal(k_in2, (B2, D), dtype=jnp.float32)
    V2, A2 = d3qn_forward(state2, prep_f32)
    jax.block_until_ready((V2, A2))
    V2_ref, A2_ref = d3qn_forward_reference(state2, params)
    assert V2.shape == (B2, 1) and A2.shape == (B2, n_actions)
    assert jnp.allclose(V2, V2_ref, atol=1e-5), "V mismatch (padded f32)"
    assert jnp.allclose(A2, A2_ref, atol=1e-5), "A mismatch (padded f32)"

    # ---- bf16 bandwidth path (v6e/v7x training / target-net eval) -----------
    # Note: ReLU output is re-rounded to bf16 before the head matmul (second
    # rounding beyond the input/weight cast) -- acceptable for RL targets.
    prep_bf16 = prepare_params(params, compute_dtype=jnp.bfloat16)
    Vb, Ab = d3qn_forward(state, prep_bf16)
    jax.block_until_ready((Vb, Ab))
    assert jnp.allclose(Vb, V_ref, atol=5e-2, rtol=5e-2), "V mismatch (bf16)"
    assert jnp.allclose(Ab, A_ref, atol=5e-2, rtol=5e-2), "A mismatch (bf16)"

    # TODO(synk): optimizer (Adam), MSE loss and checkpoint save/load from the
    # PyTorch module are training/IO concerns, not part of the forward kernel.
    print("KERNEL_OK")
</pallas_src>

<mosaic_0001>
module attributes {stable_mosaic.version = 11 : i64} {
  func.func @d3qn_kernel(%arg0: i32, %arg1: memref<8x128xf32, #tpu.memory_space<vmem>>, %arg2: memref<128x256xf32, #tpu.memory_space<vmem>>, %arg3: memref<1x256xf32, #tpu.memory_space<vmem>>, %arg4: memref<256x40xf32, #tpu.memory_space<vmem>>, %arg5: memref<1x40xf32, #tpu.memory_space<vmem>>, %arg6: memref<8x40xf32, #tpu.memory_space<vmem>>) attributes {dimension_semantics = [#tpu.dimension_semantics<parallel>], iteration_bounds = array<i64: 1>, scalar_prefetch = 0 : i64, scratch_operands = 0 : i64, tpu.core_type = #tpu.core_type<tc>, window_params = [{transform_indices = @transform_0, window_bounds = array<i64: 8, 128>}, {pipeline_mode = #tpu.pipeline_mode<synchronous>, transform_indices = @transform_1, window_bounds = array<i64: 128, 256>}, {pipeline_mode = #tpu.pipeline_mode<synchronous>, transform_indices = @transform_2, window_bounds = array<i64: 1, 256>}, {pipeline_mode = #tpu.pipeline_mode<synchronous>, transform_indices = @transform_3, window_bounds = array<i64: 256, 40>}, {pipeline_mode = #tpu.pipeline_mode<synchronous>, transform_indices = @transform_4, window_bounds = array<i64: 1, 40>}, {transform_indices = @transform_5, window_bounds = array<i64: 8, 40>}]} {
    %c0 = arith.constant 0 : index
    %c0_0 = arith.constant 0 : index
    %0 = vector.load %arg1[%c0, %c0_0] : memref<8x128xf32, #tpu.memory_space<vmem>>, vector<8x128xf32>
    %c0_1 = arith.constant 0 : index
    %c0_2 = arith.constant 0 : index
    %1 = vector.load %arg2[%c0_1, %c0_2] : memref<128x256xf32, #tpu.memory_space<vmem>>, vector<128x256xf32>
    %cst = arith.constant dense<0.000000e+00> : vector<8x256xf32>
    %2 = tpu.matmul %0, %1, %cst {dimension_numbers = #tpu.dot_dimension_numbers<[1], [0], [0], [1], [0, 0, 1, 1], [], []>} : vector<8x128xf32>, vector<128x256xf32>, vector<8x256xf32> -> vector<8x256xf32>
    %c0_3 = arith.constant 0 : index
    %c0_4 = arith.constant 0 : index
    %3 = vector.load %arg3[%c0_3, %c0_4] : memref<1x256xf32, #tpu.memory_space<vmem>>, vector<1x256xf32>
    %4 = vector.broadcast %3 : vector<1x256xf32> to vector<8x256xf32>
    %5 = arith.addf %2, %4 : vector<8x256xf32>
    %cst_5 = arith.constant 0.000000e+00 : f32
    %6 = vector.broadcast %cst_5 : f32 to vector<8x256xf32>
    %7 = arith.maximumf %5, %6 : vector<8x256xf32>
    %c0_6 = arith.constant 0 : index
    %c0_7 = arith.constant 0 : index
    %8 = vector.load %arg4[%c0_6, %c0_7] : memref<256x40xf32, #tpu.memory_space<vmem>>, vector<256x40xf32>
    %cst_8 = arith.constant dense<0.000000e+00> : vector<8x40xf32>
    %9 = tpu.matmul %7, %8, %cst_8 {dimension_numbers = #tpu.dot_dimension_numbers<[1], [0], [0], [1], [0, 0, 1, 1], [], []>} : vector<8x256xf32>, vector<256x40xf32>, vector<8x40xf32> -> vector<8x40xf32>
    %c0_9 = arith.constant 0 : index
    %c0_10 = arith.constant 0 : index
    %10 = vector.load %arg5[%c0_9, %c0_10] : memref<1x40xf32, #tpu.memory_space<vmem>>, vector<1x40xf32>
    %11 = vector.broadcast %10 : vector<1x40xf32> to vector<8x40xf32>
    %12 = arith.addf %9, %11 : vector<8x40xf32>
    %c0_11 = arith.constant 0 : index
    %c0_12 = arith.constant 0 : index
    %13 = vector.load %arg6[%c0_11, %c0_12] : memref<8x40xf32, #tpu.memory_space<vmem>>, vector<8x40xf32>
    tpu.vector_store %arg6[%c0_11, %c0_12], %12 {strides = array<i32>} : memref<8x40xf32, #tpu.memory_space<vmem>>, vector<8x40xf32>,
    return
  }
  func.func @transform_0(%arg0: i32) -> (i32, i32) {
    %c0_i32 = arith.constant 0 : i32
    %c0_i32_0 = arith.constant 0 : i32
    return %arg0, %c0_i32 : i32, i32
  }
  func.func @transform_1(%arg0: i32) -> (i32, i32) {
    %c0_i32 = arith.constant 0 : i32
    %c0_i32_0 = arith.constant 0 : i32
    %c0_i32_1 = arith.constant 0 : i32
    return %c0_i32, %c0_i32_0 : i32, i32
  }
  func.func @transform_2(%arg0: i32) -> (i32, i32) {
    %c0_i32 = arith.constant 0 : i32
    %c0_i32_0 = arith.constant 0 : i32
    %c0_i32_1 = arith.constant 0 : i32
    return %c0_i32, %c0_i32_0 : i32, i32
  }
  func.func @transform_3(%arg0: i32) -> (i32, i32) {
    %c0_i32 = arith.constant 0 : i32
    %c0_i32_0 = arith.constant 0 : i32
    %c0_i32_1 = arith.constant 0 : i32
    return %c0_i32, %c0_i32_0 : i32, i32
  }
  func.func @transform_4(%arg0: i32) -> (i32, i32) {
    %c0_i32 = arith.constant 0 : i32
    %c0_i32_0 = arith.constant 0 : i32
    %c0_i32_1 = arith.constant 0 : i32
    return %c0_i32, %c0_i32_0 : i32, i32
  }
  func.func @transform_5(%arg0: i32) -> (i32, i32) {
    %c0_i32 = arith.constant 0 : i32
    %c0_i32_0 = arith.constant 0 : i32
    return %arg0, %c0_i32 : i32, i32
  }
}

</mosaic_0001>

<llo_original>
// kernel: tpu_custom_call.1
$region0: #{tpu_custom_call.1}
  #allocation0 [shape = 'u32[]', space=smem, size = 0x4, offset = 0x4, fixed_abs, tag = 'smem constant byte address 0x4 - core index']
  #allocation1 [shape = 'u32[144,128]{1,0:T(1,128)}', space=vmem, size = 0x12000, scoped, tag = 'internal scratch']
  %s0 = inlined_call_operand.vmem [shape: f32[8,128], index: 0, kind: input, shape index: {}]
  %s1 = inlined_call_operand.vmem [shape: f32[128,256], index: 1, kind: input, shape index: {}]
  %s2 = inlined_call_operand.vmem [shape: f32[1,256], index: 2, kind: input, shape index: {}]
  %s3 = inlined_call_operand.vmem [shape: f32[256,40], index: 3, kind: input, shape index: {}]
  %s4 = inlined_call_operand.vmem [shape: f32[1,40], index: 4, kind: input, shape index: {}]
  %s5 = inlined_call_operand.hbm [shape: f32[8,40], index: 5, kind: output, shape index: {}]
  %s6 = sld [smem:[#allocation0]]
  $region30: #{tpu_custom_call.1} parent=0
    _
  %s8 = ssub.s32 1, %s6
  %s9 = scalar_select 0, %s8, %s6
  $region1: #{tpu_custom_call.1} parent=0
    #allocation2 [shape = 'u8[4096]{0}', space=vmem, size = 0x1000, scoped, tag = 'output window, operand 0, single buffered']
    #allocation3 [shape = 's32[1]{0}', space=sflag, size = 0x4, scoped, tag = 'scoped memory for tpu_custom_call.1']
    %10 = vsyncpa [#allocation3], 0
    // Predicated region
    $region2: #{tpu_custom_call.1} parent=1 // pred_check
      _
    $region3: #{tpu_custom_call.1} parent=1 // pred_check_branch
      %12 = sbr.rel (0) target = $region5
    $region4: #{tpu_custom_call.1} parent=1 // pred_region
      _
    $region5: #{tpu_custom_call.1} parent=1 // pred_fallthru
      _
    // Predicated region
    $region6: #{tpu_custom_call.1} parent=1 // pred_check
      _
    $region7: #{tpu_custom_call.1} parent=1 // pred_check_branch
      %14 = sbr.rel (0) target = $region9
    $region8: #{tpu_custom_call.1} parent=1 // pred_region
      _
    $region9: #{tpu_custom_call.1} parent=1 // pred_fallthru
      _
    // Predicated region
    $region10: #{tpu_custom_call.1} parent=1 // pred_check
      _
    $region11: #{tpu_custom_call.1} parent=1 // pred_check_branch
      %16 = sbr.rel (0) target = $region13
    $region12: #{tpu_custom_call.1} parent=1 // pred_region
      _
    $region13: #{tpu_custom_call.1} parent=1 // pred_fallthru
      _
    // Predicated region
    $region14: #{tpu_custom_call.1} parent=1 // pred_check
      _
    $region15: #{tpu_custom_call.1} parent=1 // pred_check_branch
      %18 = sbr.rel (0) target = $region17
    $region16: #{tpu_custom_call.1} parent=1 // pred_region
      _
    $region17: #{tpu_custom_call.1} parent=1 // pred_fallthru
      _
    // Predicated region
    $region18: #{tpu_custom_call.1} parent=1 // pred_check
      _
    $region19: #{tpu_custom_call.1} parent=1 // pred_check_branch
      %20 = sbr.rel (0) target = $region21
    $region20: #{tpu_custom_call.1} parent=1 // pred_region
      _
    $region21: #{tpu_custom_call.1} parent=1 // pred_fallthru
      _
    %v21 = vld [vmem:[%s0] sm:$0xff]
    %v22 = vld [vmem:[%s1] sm:$0xff]
    %v23 = vld [vmem:[%s1 + $0x8] sm:$0xff]
    %v24 = vld [vmem:[%s1 + $0x10] sm:$0xff]
    %v25 = vld [vmem:[%s1 + $0x18] sm:$0xff]
    %v26 = vld [vmem:[%s1 + $0x20] sm:$0xff]
    %v27 = vld [vmem:[%s1 + $0x28] sm:$0xff]
    %v28 = vld [vmem:[%s1 + $0x30] sm:$0xff]
    %v29 = vld [vmem:[%s1 + $0x38] sm:$0xff]
    %v30 = vld [vmem:[%s1 + $0x40] sm:$0xff]
    %v31 = vld [vmem:[%s1 + $0x48] sm:$0xff]
    %v32 = vld [vmem:[%s1 + $0x50] sm:$0xff]
    %v33 = vld [vmem:[%s1 + $0x58] sm:$0xff]
    %v34 = vld [vmem:[%s1 + $0x60] sm:$0xff]
    %v35 = vld [vmem:[%s1 + $0x68] sm:$0xff]
    %v36 = vld [vmem:[%s1 + $0x70] sm:$0xff]
    %v37 = vld [vmem:[%s1 + $0x78] sm:$0xff]
    %v38 = vld [vmem:[%s1 + $0x80] sm:$0xff]
    %v39 = vld [vmem:[%s1 + $0x88] sm:$0xff]
    %v40 = vld [vmem:[%s1 + $0x90] sm:$0xff]
    %v41 = vld [vmem:[%s1 + $0x98] sm:$0xff]
    %v42 = vld [vmem:[%s1 + $0xa0] sm:$0xff]
    %v43 = vld [vmem:[%s1 + $0xa8] sm:$0xff]
    %v44 = vld [vmem:[%s1 + $0xb0] sm:$0xff]
    %v45 = vld [vmem:[%s1 + $0xb8] sm:$0xff]
    %v46 = vld [vmem:[%s1 + $0xc0] sm:$0xff]
    %v47 = vld [vmem:[%s1 + $0xc8] sm:$0xff]
    %v48 = vld [vmem:[%s1 + $0xd0] sm:$0xff]
    %v49 = vld [vmem:[%s1 + $0xd8] sm:$0xff]
    %v50 = vld [vmem:[%s1 + $0xe0] sm:$0xff]
    %v51 = vld [vmem:[%s1 + $0xe8] sm:$0xff]
    %v52 = vld [vmem:[%s1 + $0xf0] sm:$0xff]
    %v53 = vld [vmem:[%s1 + $0xf8] sm:$0xff]
    %v54 = vld [vmem:[%s2] sm:$0x3]
    %v56 = vlaneseq
    %v57 = vshrl.u32 %v56, 7
    %v58 = vsub.s32 0, %v57
    %v59 = vrot.slane %v54, %v58
    %v60 = vlaneseq
    %v61 = vshrl.u32 %v60, 7
    %v62 = vsub.s32 1, %v61
    %v63 = vrot.slane %v54, %v62
    %66 = vmatprep.subr.mxu0 %v23
    %67 = vmatpush1.msra.mxu0 %v22
    %68 = vmatprep.subr.mxu0 %v25
    %69 = vmatpush1.msra.mxu0 %v24
    %70 = vmatprep.subr.mxu0 %v27
    %71 = vmatpush1.msra.mxu0 %v26
    %72 = vmatprep.subr.mxu0 %v29
    %73 = vmatpush1.msra.mxu0 %v28
    %74 = vmatprep.subr.mxu0 %v31
    %75 = vmatpush1.msra.mxu0 %v30
    %76 = vmatprep.subr.mxu0 %v33
    %77 = vmatpush1.msra.mxu0 %v32
    %78 = vmatprep.subr.mxu0 %v35
    %79 = vmatpush1.msra.mxu0 %v34
    %80 = vmatprep.subr.mxu0 %v37
    %81 = vmatpush1.msra.mxu0 %v36
    %82 = vmatprep.subr.mxu0 %v39
    %83 = vmatpush1.msra.mxu0 %v38
    %84 = vmatprep.subr.mxu0 %v41
    %85 = vmatpush1.msra.mxu0 %v40
    %86 = vmatprep.subr.mxu0 %v43
    %87 = vmatpush1.msra.mxu0 %v42
    %88 = vmatprep.subr.mxu0 %v45
    %89 = vmatpush1.msra.mxu0 %v44
    %90 = vmatprep.subr.mxu0 %v47
    %91 = vmatpush1.msra.mxu0 %v46
    %92 = vmatprep.subr.mxu0 %v49
    %93 = vmatpush1.msra.mxu0 %v48
    %94 = vmatprep.subr.mxu0 %v51
    %95 = vmatpush1.msra.mxu0 %v50
    %96 = vmatprep.subr.mxu0 %v53
    %97 = vmatpush1.msra.mxu0 %v52
    %98 = vmatprep.subr.mxu0 0.0
    %99 = vmatpush1.msra.mxu0 0.0
    %100 = vmatprep.subr.mxu0 0.0
    %101 = vmatpush1.msra.mxu0 0.0
    %102 = vmatprep.subr.mxu0 0.0
    %103 = vmatpush1.msra.mxu0 0.0
    %104 = vmatprep.subr.mxu0 0.0
    %105 = vmatpush1.msra.mxu0 0.0
    %106 = vmatprep.subr.mxu0 0.0
    %107 = vmatpush1.msra.mxu0 0.0
    %108 = vmatprep.subr.mxu0 0.0
    %109 = vmatpush1.msra.mxu0 0.0
    %110 = vmatprep.subr.mxu0 0.0
    %111 = vmatpush1.msra.mxu0 0.0
    %112 = vmatprep.subr.mxu0 0.0
    %113 = vmatpush1.msra.mxu0 0.0
    %114 = vmatprep.subr.mxu0 0.0
    %115 = vmatpush1.msra.mxu0 0.0
    %116 = vmatprep.subr.mxu0 0.0
    %117 = vmatpush1.msra.mxu0 0.0
    %118 = vmatprep.subr.mxu0 0.0
    %119 = vmatpush1.msra.mxu0 0.0
    %120 = vmatprep.subr.mxu0 0.0
    %121 = vmatpush1.msra.mxu0 0.0
    %122 = vmatprep.subr.mxu0 0.0
    %123 = vmatpush1.msra.mxu0 0.0
    %124 = vmatprep.subr.mxu0 0.0
    %125 = vmatpush1.msra.mxu0 0.0
    %126 = vmatprep.subr.mxu0 0.0
    %127 = vmatpush1.msra.mxu0 0.0
    %128 = vmatprep.subr.mxu0 0.0
    %129 = vmatpush1.msra.mxu0 0.0
    %130 = vmatprep.mubr.f32.mxu0 0.0
    %131 = vmatmul.mubr.f32.gmra.mrb[0].mxu0 %v21
    %v132 = vpop.f32.mrb[0].mxu0
    %v133 = vadd.f32 %v59, %v132
    %v134 = vpop.f32.mrb[0].mxu0
    %v135 = vadd.f32 %v63, %v134
    %136 = vdwg.mxu0
    %v137 = vmax.f32 %v133, 0.0
    %v138 = vmax.f32 %v135, 0.0
    %v139 = vld [vmem:[%s3] sm:$0xff]
    %v140 = vld [vmem:[%s3 + $0x8] sm:$0xff]
    %v141 = vld [vmem:[%s3 + $0x10] sm:$0xff]
    %v142 = vld [vmem:[%s3 + $0x18] sm:$0xff]
    %v143 = vld [vmem:[%s3 + $0x20] sm:$0xff]
    %v144 = vld [vmem:[%s3 + $0x28] sm:$0xff]
    %v145 = vld [vmem:[%s3 + $0x30] sm:$0xff]
    %v146 = vld [vmem:[%s3 + $0x38] sm:$0xff]
    %v147 = vld [vmem:[%s3 + $0x40] sm:$0xff]
    %v148 = vld [vmem:[%s3 + $0x48] sm:$0xff]
    %v149 = vld [vmem:[%s3 + $0x50] sm:$0xff]
    %v150 = vld [vmem:[%s3 + $0x58] sm:$0xff]
    %v151 = vld [vmem:[%s3 + $0x60] sm:$0xff]
    %v152 = vld [vmem:[%s3 + $0x68] sm:$0xff]
    %v153 = vld [vmem:[%s3 + $0x70] sm:$0xff]
    %v154 = vld [vmem:[%s3 + $0x78] sm:$0xff]
    %v155 = vld [vmem:[%s3 + $0x80] sm:$0xff]
    %v156 = vld [vmem:[%s3 + $0x88] sm:$0xff]
    %v157 = vld [vmem:[%s3 + $0x90] sm:$0xff]
    %v158 = vld [vmem:[%s3 + $0x98] sm:$0xff]
    %v159 = vld [vmem:[%s3 + $0xa0] sm:$0xff]
    %v160 = vld [vmem:[%s3 + $0xa8] sm:$0xff]
    %v161 = vld [vmem:[%s3 + $0xb0] sm:$0xff]
    %v162 = vld [vmem:[%s3 + $0xb8] sm:$0xff]
    %v163 = vld [vmem:[%s3 + $0xc0] sm:$0xff]
    %v164 = vld [vmem:[%s3 + $0xc8] sm:$0xff]
    %v165 = vld [vmem:[%s3 + $0xd0] sm:$0xff]
    %v166 = vld [vmem:[%s3 + $0xd8] sm:$0xff]
    %v167 = vld [vmem:[%s3 + $0xe0] sm:$0xff]
    %v168 = vld [vmem:[%s3 + $0xe8] sm:$0xff]
    %v169 = vld [vmem:[%s3 + $0xf0] sm:$0xff]
    %v170 = vld [vmem:[%s3 + $0xf8] sm:$0xff]
    %v171 = vld [vmem:[%s4] sm:$0x1]
    %v173 = vlaneseq
    %v174 = vshrl.u32 %v173, 7
    %v175 = vsub.s32 0, %v174
    %v176 = vrot.slane %v171, %v175
    %178 = vmatprep.subr.mxu0 0.0
    %179 = vmatpush1.msra.mxu0 %v139
    %180 = vmatprep.subr.mxu0 0.0
    %181 = vmatpush1.msra.mxu0 %v140
    %182 = vmatprep.subr.mxu0 0.0
    %183 = vmatpush1.msra.mxu0 %v141
    %184 = vmatprep.subr.mxu0 0.0
    %185 = vmatpush1.msra.mxu0 %v142
    %186 = vmatprep.subr.mxu0 0.0
    %187 = vmatpush1.msra.mxu0 %v143
    %188 = vmatprep.subr.mxu0 0.0
    %189 = vmatpush1.msra.mxu0 %v144
    %190 = vmatprep.subr.mxu0 0.0
    %191 = vmatpush1.msra.mxu0 %v145
    %192 = vmatprep.subr.mxu0 0.0
    %193 = vmatpush1.msra.mxu0 %v146
    %194 = vmatprep.subr.mxu0 0.0
    %195 = vmatpush1.msra.mxu0 %v147
    %196 = vmatprep.subr.mxu0 0.0
    %197 = vmatpush1.msra.mxu0 %v148
    %198 = vmatprep.subr.mxu0 0.0
    %199 = vmatpush1.msra.mxu0 %v149
    %200 = vmatprep.subr.mxu0 0.0
    %201 = vmatpush1.msra.mxu0 %v150
    %202 = vmatprep.subr.mxu0 0.0
    %203 = vmatpush1.msra.mxu0 %v151
    %204 = vmatprep.subr.mxu0 0.0
    %205 = vmatpush1.msra.mxu0 %v152
    %206 = vmatprep.subr.mxu0 0.0
    %207 = vmatpush1.msra.mxu0 %v153
    %208 = vmatprep.subr.mxu0 0.0
    %209 = vmatpush1.msra.mxu0 %v154
    %210 = vmatprep.subr.mxu0 0.0
    %211 = vmatpush1.msra.mxu0 %v155
    %212 = vmatprep.subr.mxu0 0.0
    %213 = vmatpush1.msra.mxu0 %v156
    %214 = vmatprep.subr.mxu0 0.0
    %215 = vmatpush1.msra.mxu0 %v157
    %216 = vmatprep.subr.mxu0 0.0
    %217 = vmatpush1.msra.mxu0 %v158
    %218 = vmatprep.subr.mxu0 0.0
    %219 = vmatpush1.msra.mxu0 %v159
    %220 = vmatprep.subr.mxu0 0.0
    %221 = vmatpush1.msra.mxu0 %v160
    %222 = vmatprep.subr.mxu0 0.0
    %223 = vmatpush1.msra.mxu0 %v161
    %224 = vmatprep.subr.mxu0 0.0
    %225 = vmatpush1.msra.mxu0 %v162
    %226 = vmatprep.subr.mxu0 0.0
    %227 = vmatpush1.msra.mxu0 %v163
    %228 = vmatprep.subr.mxu0 0.0
    %229 = vmatpush1.msra.mxu0 %v164
    %230 = vmatprep.subr.mxu0 0.0
    %231 = vmatpush1.msra.mxu0 %v165
    %232 = vmatprep.subr.mxu0 0.0
    %233 = vmatpush1.msra.mxu0 %v166
    %234 = vmatprep.subr.mxu0 0.0
    %235 = vmatpush1.msra.mxu0 %v167
    %236 = vmatprep.subr.mxu0 0.0
    %237 = vmatpush1.msra.mxu0 %v168
    %238 = vmatprep.subr.mxu0 0.0
    %239 = vmatpush1.msra.mxu0 %v169
    %240 = vmatprep.subr.mxu0 0.0
    %241 = vmatpush1.msra.mxu0 %v170
    %242 = vmatprep.mubr.f32.mxu0 %v138
    %243 = vmatmul.mubr.f32.gmra.mrb[0].mxu0 %v137
    %v244 = vpop.f32.mrb[0].mxu0
    %v245 = vadd.f32 %v176, %v244
    %v246 = vpop.f32.mrb[0].mxu0
    %247 = vdwg.mxu0
    %vm248 = vcmask 326656
    %249 = vst.msk [vmem:[#allocation2] sm:$0xff] %vm248, %v245
    // Predicated region
    $region22: #{tpu_custom_call.1} parent=1 // pred_check
      _
    $region23: #{tpu_custom_call.1} parent=1 // pred_check_branch
      %251 = sbr.rel (0) target = $region25
    $region24: #{tpu_custom_call.1} parent=1 // pred_region
      %s253 = ssub.s32 128, 128
      %254 = vsyncadd [#allocation3], %s253
      %s256 = sshll.u32 [#allocation2], 4
      %s257 = int_to_ptr.vmem [resolvable:$true] %s256
      %259 = dma.vmem_to_hbm [thread:$0]  %s257, 128, %s5, [#allocation3]
    $region25: #{tpu_custom_call.1} parent=1 // pred_fallthru
      _
    // Predicated region
    $region26: #{tpu_custom_call.1} parent=1 // pred_check
      _
    $region27: #{tpu_custom_call.1} parent=1 // pred_check_branch
      %261 = sbr.rel (0) target = $region29
    $region28: #{tpu_custom_call.1} parent=1 // pred_region
      %262 = dma.done [#allocation3], 128
    $region29: #{tpu_custom_call.1} parent=1 // pred_fallthru
      _
    %263 = vsyncpa [#allocation3], 1

</llo_original>
